<compile_context>
chip_gen: v6e
topology: v6e:2x2x1
jax: 0.10.0
libtpu: 0.0.40
codegen_flags: <defaults>
</compile_context>

<pallas_src>
import functools

import jax
import jax.numpy as jnp
import numpy as np
from jax.experimental import pallas as pl
from jax.experimental.pallas import tpu as pltpu


def _round_up(a, b):
    return (a + b - 1) // b * b


# ---------------------------------------------------------------------------
# Trace-time parameter fusion — call ONCE (module init), NOT per forward.
# ---------------------------------------------------------------------------
def fuse_tokenizer_params(params, *, L, C, groups, input_channels):
    """Fused weight row layout (split points are 8-sublane aligned):
         [0, C)         grouped 1x1 conv_value as a dense block-diagonal
         [C, Cpad)      zero rows so the coef block starts on an 8-aligned row
         [Cpad, Cpad+L) conv_token_coef rows, pre-scaled by 1/sqrt(C)
    """
    Cg = C // groups
    Cpad = _round_up(C, 8)
    pad = Cpad - C
    inv_sqrt_c = 1.0 / float(np.sqrt(C))

    wv_blocks = params["wv"].reshape(groups, Cg, Cg).astype(jnp.float32)   # [g, out, in]
    wv_full = jnp.zeros((C, C), jnp.float32)
    for g in range(groups):
        wv_full = wv_full.at[g * Cg:(g + 1) * Cg, g * Cg:(g + 1) * Cg].set(wv_blocks[g])
    # TODO(synk): for the C_in == C path with Cg = C//groups >= 128, keep wv as
    # (groups, Cg, Cg) and do a per-group batched matmul in the kernel instead of this
    # dense block-diagonal (recovers ~groups x FLOPs on the value GEMM when MXU-bound).

    wtc = params["wtc"].reshape(L, C).astype(jnp.float32) * inv_sqrt_c     # fold 1/sqrt(C)
    bv = params["bv"].reshape(C).astype(jnp.float32)
    btc = params["btc"].reshape(L).astype(jnp.float32) * inv_sqrt_c

    wcv = jnp.concatenate([wv_full, jnp.zeros((pad, C), jnp.float32), wtc], axis=0)
    bcv = jnp.concatenate([bv, jnp.zeros((pad,), jnp.float32), btc], axis=0)

    fused = {"wcv": wcv.astype(jnp.bfloat16),            # (Cpad+L, C)   nofeat path
             "bcv": bcv.reshape(Cpad + L, 1)}            # f32

    if input_channels != C:
        wf = params["wf"].reshape(C, input_channels).astype(jnp.float32)
        bf = params["bf"].reshape(C).astype(jnp.float32)
        # Pre-multiply the fused weight through the 1x1 feature conv (exact in f32):
        #   wcv @ (wf @ x + bf) == (wcv @ wf) @ x + (wcv @ bf)
        wp = wcv @ wf                                    # (Cpad+L, C_in)
        bp = wcv @ bf + bcv                              # (Cpad+L,)
        fused.update({"wf": wf.astype(jnp.bfloat16),     # (C, C_in)  feature output GEMM
                      "bf": bf.reshape(C, 1),            # f32
                      "wp": wp.astype(jnp.bfloat16),     # (Cpad+L, C_in)
                      "bp": bp.reshape(Cpad + L, 1)})    # f32
    return fused


# ---------------------------------------------------------------------------
# Kernels
# ---------------------------------------------------------------------------
def _col_to_row(v_col, n):
    """(n, 1) f32 -> (1, n) f32 without a transpose/relayout (iota-select + sublane sum)."""
    row = jax.lax.broadcasted_iota(jnp.int32, (n, n), 0)
    col = jax.lax.broadcasted_iota(jnp.int32, (n, n), 1)
    return jnp.sum(jnp.where(row == col, v_col, 0.0), axis=0, keepdims=True)


def _online_token_update(fused, t, m_sc, l_sc, acc_sc, *, C, Cpad, L, HW, tile_hw,
                         needs_mask):
    """Flash-style online softmax over the spatial tiles; token acc stays (C, L) in VMEM."""
    value = fused[:C, :]            # (C, tHW)  aligned view (starts at row 0)
    coef = fused[Cpad:, :]          # (L, tHW)  aligned view (Cpad % 8 == 0); already /sqrt(C)

    if needs_mask:                  # only traced when HW % tile_hw != 0
        lane = jax.lax.broadcasted_iota(jnp.int32, (L, tile_hw), 1)
        coef = jnp.where(lane < (HW - t * tile_hw), coef, -jnp.inf)

    tile_max = jnp.max(coef, axis=1, keepdims=True)               # (L, 1)
    m_new = jnp.maximum(m_sc[...], tile_max)
    alpha = jnp.exp(m_sc[...] - m_new)                            # (L, 1)
    p = jnp.exp(coef - m_new)                                     # (L, tHW); masked lanes -> 0
    l_sc[...] = alpha * l_sc[...] + jnp.sum(p, axis=1, keepdims=True)
    m_sc[...] = m_new

    # token contribution: value (C, tHW) · p (L, tHW) contracted over tHW -> (C, L)
    contrib = jax.lax.dot_general(
        value.astype(jnp.bfloat16), p.astype(jnp.bfloat16),
        (((1,), (1,)), ((), ())), preferred_element_type=jnp.float32)
    acc_sc[...] = acc_sc[...] * _col_to_row(alpha, L) + contrib


def _finalize_token(tok_ref, l_sc, acc_sc, *, L):
    inv_l = pl.reciprocal(l_sc[...], approx=True)                 # (L, 1), EUP slot
    tok_ref[0] = (acc_sc[...] * _col_to_row(inv_l, L)).astype(tok_ref.dtype)


def _tokenizer_kernel_feat(x_ref, wf_ref, bf_ref, wp_ref, bp_ref,
                           feat_ref, tok_ref, m_sc, l_sc, acc_sc, *,
                           C, Cpad, L, HW, tile_hw, needs_mask):
    t = pl.program_id(1)

    @pl.when(t == 0)
    def _():
        m_sc[...] = jnp.full(m_sc.shape, -jnp.inf, m_sc.dtype)
        l_sc[...] = jnp.zeros(l_sc.shape, l_sc.dtype)
        acc_sc[...] = jnp.zeros(acc_sc.shape, acc_sc.dtype)

    x_b = x_ref[0].astype(jnp.bfloat16)                           # (C_in, tHW)

    # Feature output GEMM (kept only because `feature` is a module output).
    feat = jnp.dot(wf_ref[...], x_b, preferred_element_type=jnp.float32) + bf_ref[...]
    feat_ref[0] = feat.astype(feat_ref.dtype)
    # TODO(synk): store feat in bf16 when the consumer tolerates it (v5e is HBM-bound here).

    # Fused value+coef GEMM, pre-multiplied through the feature conv: contraction = C_in.
    fused = jnp.dot(wp_ref[...], x_b, preferred_element_type=jnp.float32) + bp_ref[...]
    _online_token_update(fused, t, m_sc, l_sc, acc_sc, C=C, Cpad=Cpad, L=L,
                         HW=HW, tile_hw=tile_hw, needs_mask=needs_mask)

    @pl.when(t == pl.num_programs(1) - 1)
    def _():
        _finalize_token(tok_ref, l_sc, acc_sc, L=L)


def _tokenizer_kernel_nofeat(x_ref, wcv_ref, bcv_ref,
                             tok_ref, m_sc, l_sc, acc_sc, *,
                             C, Cpad, L, HW, tile_hw, needs_mask):
    t = pl.program_id(1)

    @pl.when(t == 0)
    def _():
        m_sc[...] = jnp.full(m_sc.shape, -jnp.inf, m_sc.dtype)
        l_sc[...] = jnp.zeros(l_sc.shape, l_sc.dtype)
        acc_sc[...] = jnp.zeros(acc_sc.shape, acc_sc.dtype)

    x_b = x_ref[0].astype(jnp.bfloat16)                           # (C, tHW)
    fused = jnp.dot(wcv_ref[...], x_b, preferred_element_type=jnp.float32) + bcv_ref[...]
    _online_token_update(fused, t, m_sc, l_sc, acc_sc, C=C, Cpad=Cpad, L=L,
                         HW=HW, tile_hw=tile_hw, needs_mask=needs_mask)

    @pl.when(t == pl.num_programs(1) - 1)
    def _():
        _finalize_token(tok_ref, l_sc, acc_sc, L=L)


# ---------------------------------------------------------------------------
# Forward wrapper
# ---------------------------------------------------------------------------
def conv_tokenizer_forward(x_nchw, fused, *, L, C, head, groups, tile_hw=None):
    """Returns (feature NCHW, token (N, L, C)) — same semantics as the PyTorch module.
    `head` is unused by design: coef is broadcast across heads in the reference."""
    N, C_in, H, W = x_nchw.shape
    HW = H * W
    apply_feature = (C_in != C)
    Cpad = _round_up(C, 8)

    # ---- spatial tile: lane-dense (multiple of 128), sized to keep temporaries modest ----
    if tile_hw is None:
        per_lane = 4 * ((Cpad + L) + 2 * C + C_in + L)      # rough f32 bytes / spatial pos
        tile_hw = (8 << 20) // max(per_lane, 1)
        tile_hw = min(2048, tile_hw)
    tile_hw = max(128, (tile_hw // 128) * 128)
    tile_hw = min(tile_hw, _round_up(HW, 128))
    HW_pad = _round_up(HW, tile_hw)
    n_hw = HW_pad // tile_hw
    needs_mask = HW_pad != HW

    x = x_nchw.reshape(N, C_in, HW)                         # free reshape, no transpose
    if needs_mask:
        x = jnp.pad(x, ((0, 0), (0, 0), (0, HW_pad - HW)))  # padded lanes masked in-kernel

    # ---- VMEM budget: tiled per-step footprint, 2x headroom, capped below v7x's 64 MiB ----
    cin_eff = C_in if apply_feature else C
    w_bytes = 2 * (Cpad + L) * cin_eff + (2 * C * C_in if apply_feature else 0) \
        + 4 * (Cpad + L + (C if apply_feature else 0))
    io_bytes = 2 * 4 * C_in * tile_hw \
        + (2 * 4 * C * tile_hw if apply_feature else 0) + 2 * 4 * C * L
    tmp_bytes = 4 * (Cpad + L) * tile_hw + 6 * C * tile_hw + 6 * L * tile_hw \
        + 2 * C_in * tile_hw
    scratch_bytes = 4 * C * L + 8 * L
    need = 2 * w_bytes + io_bytes + tmp_bytes + scratch_bytes
    vmem_limit = int(min(max(2 * need + (4 << 20), 32 << 20), 48 << 20))

    flops = 2 * N * HW_pad * (((C * C_in) if apply_feature else 0)
                              + (Cpad + L) * cin_eff + C * L)
    bytes_accessed = (4 * N * C_in * HW_pad
                      + (4 * N * C * HW_pad if apply_feature else 0)
                      + 4 * N * C * L + w_bytes)
    cost = pl.CostEstimate(flops=flops, transcendentals=N * L * HW_pad,
                           bytes_accessed=bytes_accessed)

    # TODO(synk): for N == 1 inference on v7x, add an outer "parallel" HW super-tile axis
    # with a two-pass softmax (per-core partial m/l/(C,L) acc + tiny combine) so both
    # TensorCores are busy; with grid=(N, n_hw) only the batch axis is core-parallel.
    compiler_params = pltpu.CompilerParams(
        dimension_semantics=("parallel", "arbitrary"),
        vmem_limit_bytes=vmem_limit)

    scratch_shapes = [pltpu.VMEM((L, 1), jnp.float32),      # running max m
                      pltpu.VMEM((L, 1), jnp.float32),      # running sum l
                      pltpu.VMEM((C, L), jnp.float32)]      # token accumulator

    if apply_feature:
        kernel = functools.partial(
            _tokenizer_kernel_feat, C=C, Cpad=Cpad, L=L,
            HW=HW, tile_hw=tile_hw, needs_mask=needs_mask)
        feat_flat, token_cl = pl.pallas_call(
            kernel,
            out_shape=(jax.ShapeDtypeStruct((N, C, HW_pad), jnp.float32),
                       jax.ShapeDtypeStruct((N, C, L), jnp.float32)),
            grid_spec=pltpu.PrefetchScalarGridSpec(
                num_scalar_prefetch=0,
                grid=(N, n_hw),
                in_specs=[
                    pl.BlockSpec((1, C_in, tile_hw), lambda n, t: (n, 0, t)),
                    pl.BlockSpec((C, C_in), lambda n, t: (0, 0)),
                    pl.BlockSpec((C, 1), lambda n, t: (0, 0)),
                    pl.BlockSpec((Cpad + L, C_in), lambda n, t: (0, 0)),
                    pl.BlockSpec((Cpad + L, 1), lambda n, t: (0, 0)),
                ],
                out_specs=[
                    pl.BlockSpec((1, C, tile_hw), lambda n, t: (n, 0, t)),
                    pl.BlockSpec((1, C, L), lambda n, t: (n, 0, 0)),
                ],
                scratch_shapes=scratch_shapes),
            compiler_params=compiler_params,
            cost_estimate=cost,
        )(x, fused["wf"], fused["bf"], fused["wp"], fused["bp"])
        feature_out = feat_flat[:, :, :HW].reshape(N, C, H, W)
    else:
        kernel = functools.partial(
            _tokenizer_kernel_nofeat, C=C, Cpad=Cpad, L=L,
            HW=HW, tile_hw=tile_hw, needs_mask=needs_mask)
        token_cl = pl.pallas_call(
            kernel,
            out_shape=jax.ShapeDtypeStruct((N, C, L), jnp.float32),
            grid_spec=pltpu.PrefetchScalarGridSpec(
                num_scalar_prefetch=0,
                grid=(N, n_hw),
                in_specs=[
                    pl.BlockSpec((1, C, tile_hw), lambda n, t: (n, 0, t)),
                    pl.BlockSpec((Cpad + L, C), lambda n, t: (0, 0)),
                    pl.BlockSpec((Cpad + L, 1), lambda n, t: (0, 0)),
                ],
                out_specs=pl.BlockSpec((1, C, L), lambda n, t: (n, 0, 0)),
                scratch_shapes=scratch_shapes),
            compiler_params=compiler_params,
            cost_estimate=cost,
        )(x, fused["wcv"], fused["bcv"])
        feature_out = x_nchw   # PyTorch returns the input tensor itself when C_in == C

    # PyTorch does `.view(N, C, L)` then `.view(N, L, C)` — a raw row-major
    # reinterpretation (channels/tokens interleave), NOT a transpose. This reshape of the
    # row-major (N, C, L) output is the identical bit-level reinterpretation (free).
    token = token_cl.reshape(N, L, C)
    return feature_out, token


# ---------------------------------------------------------------------------
# Pure-JAX f32 reference (mirrors the PyTorch forward)
# ---------------------------------------------------------------------------
def reference_forward(x_nchw, params, *, L, C, head, groups):
    N, C_in, H, W = x_nchw.shape
    if C_in != C:
        feat = (jnp.einsum('nihw,oi->nohw', x_nchw, params["wf"].reshape(C, C_in))
                + params["bf"][None, :, None, None])
    else:
        feat = x_nchw
    coef = (jnp.einsum('nchw,lc->nlhw', feat, params["wtc"].reshape(L, C))
            + params["btc"][None, :, None, None])                           # (N, L, H, W)
    coef = coef.reshape(N, 1, L, H * W).transpose(0, 1, 3, 2)                # (N, 1, HW, L)
    coef = coef / jnp.sqrt(jnp.float32(C))
    coef = jax.nn.softmax(coef, axis=2)

    Cg = C // groups
    feat_g = feat.reshape(N, groups, Cg, H, W)
    wv_g = params["wv"].reshape(groups, Cg, Cg)
    value = (jnp.einsum('ngihw,goi->ngohw', feat_g, wv_g).reshape(N, C, H, W)
             + params["bv"][None, :, None, None])
    value = value.reshape(N, head, C // head, H * W)
    token = jnp.matmul(value, coef)                                          # (N, head, C//head, L)
    token = token.reshape(N, C, -1).reshape(N, L, C)
    return feat, token


if __name__ == "__main__":
    # small config consistent with the module (scaled down from the defaults)
    N, C_in, H, W = 2, 16, 16, 16
    C, L, head, groups = 32, 8, 4, 4

    key = jax.random.PRNGKey(0)
    ks = jax.random.split(key, 9)
    params = {
        "wf":  0.1 * jax.random.normal(ks[0], (C, C_in, 1, 1), jnp.float32),
        "bf":  0.1 * jax.random.normal(ks[1], (C,), jnp.float32),
        "wtc": 0.1 * jax.random.normal(ks[2], (L, C, 1, 1), jnp.float32),
        "btc": 0.1 * jax.random.normal(ks[3], (L,), jnp.float32),
        "wv":  0.1 * jax.random.normal(ks[4], (C, C // groups, 1, 1), jnp.float32),
        "bv":  0.1 * jax.random.normal(ks[5], (C,), jnp.float32),
    }

    # Parameter fusion hoisted out of the per-call path (done once, like module init).
    fused = fuse_tokenizer_params(params, L=L, C=C, groups=groups, input_channels=C_in)

    fwd = jax.jit(conv_tokenizer_forward,
                  static_argnames=("L", "C", "head", "groups", "tile_hw"))
    tol = dict(rtol=2e-2, atol=2e-2)   # bf16 MXU operands, f32 accumulation

    # path 1: C_in != C, HW=256 -> 2 spatial tiles of 128 (exercises the online softmax)
    x = jax.random.normal(ks[6], (N, C_in, H, W), jnp.float32)
    feat_k, tok_k = fwd(x, fused, L=L, C=C, head=head, groups=groups, tile_hw=128)
    jax.block_until_ready((feat_k, tok_k))
    feat_r, tok_r = reference_forward(x, params, L=L, C=C, head=head, groups=groups)
    assert feat_k.shape == (N, C, H, W) and tok_k.shape == (N, L, C)
    np.testing.assert_allclose(np.asarray(feat_k), np.asarray(feat_r), **tol)
    np.testing.assert_allclose(np.asarray(tok_k), np.asarray(tok_r), **tol)

    # path 2: C_in == C -> feature conv skipped, input passthrough
    x2 = jax.random.normal(ks[7], (N, C, H, W), jnp.float32)
    feat_k2, tok_k2 = fwd(x2, fused, L=L, C=C, head=head, groups=groups, tile_hw=128)
    jax.block_until_ready((feat_k2, tok_k2))
    feat_r2, tok_r2 = reference_forward(x2, params, L=L, C=C, head=head, groups=groups)
    np.testing.assert_allclose(np.asarray(feat_k2), np.asarray(feat_r2), **tol)
    np.testing.assert_allclose(np.asarray(tok_k2), np.asarray(tok_r2), **tol)

    # path 3: H*W = 196 (not a multiple of 128) -> padded last tile + in-kernel softmax mask
    x3 = jax.random.normal(ks[8], (N, C_in, 14, 14), jnp.float32)
    feat_k3, tok_k3 = fwd(x3, fused, L=L, C=C, head=head, groups=groups, tile_hw=128)
    jax.block_until_ready((feat_k3, tok_k3))
    feat_r3, tok_r3 = reference_forward(x3, params, L=L, C=C, head=head, groups=groups)
    np.testing.assert_allclose(np.asarray(feat_k3), np.asarray(feat_r3), **tol)
    np.testing.assert_allclose(np.asarray(tok_k3), np.asarray(tok_r3), **tol)

    print("KERNEL_OK")
</pallas_src>

<mosaic_0001>
module attributes {stable_mosaic.version = 11 : i64} {
  func.func @_tokenizer_kernel_feat(%arg0: i32, %arg1: i32, %arg2: memref<1x16x128xf32, #tpu.memory_space<vmem>>, %arg3: memref<32x16xbf16, #tpu.memory_space<vmem>>, %arg4: memref<32x1xf32, #tpu.memory_space<vmem>>, %arg5: memref<40x16xbf16, #tpu.memory_space<vmem>>, %arg6: memref<40x1xf32, #tpu.memory_space<vmem>>, %arg7: memref<1x32x128xf32, #tpu.memory_space<vmem>>, %arg8: memref<1x32x8xf32, #tpu.memory_space<vmem>>, %arg9: memref<8x1xf32, #tpu.memory_space<vmem>>, %arg10: memref<8x1xf32, #tpu.memory_space<vmem>>, %arg11: memref<32x8xf32, #tpu.memory_space<vmem>>) attributes {dimension_semantics = [#tpu.dimension_semantics<parallel>, #tpu.dimension_semantics<arbitrary>], iteration_bounds = array<i64: 2, 2>, scalar_prefetch = 0 : i64, scratch_operands = 3 : i64, tpu.core_type = #tpu.core_type<tc>, window_params = [{transform_indices = @transform_0, window_bounds = array<i64: 1, 16, 128>}, {pipeline_mode = #tpu.pipeline_mode<synchronous>, transform_indices = @transform_1, window_bounds = array<i64: 32, 16>}, {pipeline_mode = #tpu.pipeline_mode<synchronous>, transform_indices = @transform_2, window_bounds = array<i64: 32, 1>}, {pipeline_mode = #tpu.pipeline_mode<synchronous>, transform_indices = @transform_3, window_bounds = array<i64: 40, 16>}, {pipeline_mode = #tpu.pipeline_mode<synchronous>, transform_indices = @transform_4, window_bounds = array<i64: 40, 1>}, {transform_indices = @transform_5, window_bounds = array<i64: 1, 32, 128>}, {transform_indices = @transform_6, window_bounds = array<i64: 1, 32, 8>}]} {
    %c0_i32 = arith.constant 0 : i32
    %0 = arith.cmpi eq, %arg1, %c0_i32 : i32
    %1 = arith.extui %0 : i1 to i32
    %c0_i32_0 = arith.constant 0 : i32
    %2 = arith.cmpi ne, %1, %c0_i32_0 : i32
    scf.if %2 {
      %cst_35 = arith.constant 0xFF800000 : f32
      %58 = vector.broadcast %cst_35 : f32 to vector<8x1xf32>
      %c0_36 = arith.constant 0 : index
      %c0_37 = arith.constant 0 : index
      %59 = vector.load %arg9[%c0_36, %c0_37] : memref<8x1xf32, #tpu.memory_space<vmem>>, vector<8x1xf32>
      tpu.vector_store %arg9[%c0_36, %c0_37], %58 {strides = array<i32>} : memref<8x1xf32, #tpu.memory_space<vmem>>, vector<8x1xf32>,
      %cst_38 = arith.constant 0.000000e+00 : f32
      %60 = vector.broadcast %cst_38 : f32 to vector<8x1xf32>
      %c0_39 = arith.constant 0 : index
      %c0_40 = arith.constant 0 : index
      %61 = vector.load %arg10[%c0_39, %c0_40] : memref<8x1xf32, #tpu.memory_space<vmem>>, vector<8x1xf32>
      tpu.vector_store %arg10[%c0_39, %c0_40], %60 {strides = array<i32>} : memref<8x1xf32, #tpu.memory_space<vmem>>, vector<8x1xf32>,
      %cst_41 = arith.constant 0.000000e+00 : f32
      %62 = vector.broadcast %cst_41 : f32 to vector<32x8xf32>
      %c0_42 = arith.constant 0 : index
      %c0_43 = arith.constant 0 : index
      %63 = vector.load %arg11[%c0_42, %c0_43] : memref<32x8xf32, #tpu.memory_space<vmem>>, vector<32x8xf32>
      tpu.vector_store %arg11[%c0_42, %c0_43], %62 {strides = array<i32>} : memref<32x8xf32, #tpu.memory_space<vmem>>, vector<32x8xf32>,
    } else {
    }
    %c0 = arith.constant 0 : index
    %c0_1 = arith.constant 0 : index
    %c0_2 = arith.constant 0 : index
    %3 = vector.load %arg2[%c0, %c0_1, %c0_2] : memref<1x16x128xf32, #tpu.memory_space<vmem>>, vector<1x16x128xf32>
    %4 = vector.shape_cast %3 : vector<1x16x128xf32> to vector<16x128xf32>
    %5 = arith.truncf %4 : vector<16x128xf32> to vector<16x128xbf16>
    %c0_3 = arith.constant 0 : index
    %c0_4 = arith.constant 0 : index
    %6 = vector.load %arg3[%c0_3, %c0_4] : memref<32x16xbf16, #tpu.memory_space<vmem>>, vector<32x16xbf16>
    %cst = arith.constant dense<0.000000e+00> : vector<32x128xf32>
    %7 = tpu.matmul %6, %5, %cst {dimension_numbers = #tpu.dot_dimension_numbers<[1], [0], [0], [1], [0, 0, 1, 1], [], []>} : vector<32x16xbf16>, vector<16x128xbf16>, vector<32x128xf32> -> vector<32x128xf32>
    %c0_5 = arith.constant 0 : index
    %c0_6 = arith.constant 0 : index
    %8 = vector.load %arg4[%c0_5, %c0_6] : memref<32x1xf32, #tpu.memory_space<vmem>>, vector<32x1xf32>
    %9 = vector.broadcast %8 : vector<32x1xf32> to vector<32x128xf32>
    %10 = arith.addf %7, %9 : vector<32x128xf32>
    %c0_7 = arith.constant 0 : index
    %c0_8 = arith.constant 0 : index
    %c0_9 = arith.constant 0 : index
    %11 = vector.load %arg7[%c0_7, %c0_8, %c0_9] : memref<1x32x128xf32, #tpu.memory_space<vmem>>, vector<1x32x128xf32>
    %12 = vector.shape_cast %11 : vector<1x32x128xf32> to vector<32x128xf32>
    %13 = vector.shape_cast %10 : vector<32x128xf32> to vector<1x32x128xf32>
    tpu.vector_store %arg7[%c0_7, %c0_8, %c0_9], %13 {strides = array<i32>} : memref<1x32x128xf32, #tpu.memory_space<vmem>>, vector<1x32x128xf32>,
    %c0_10 = arith.constant 0 : index
    %c0_11 = arith.constant 0 : index
    %14 = vector.load %arg5[%c0_10, %c0_11] : memref<40x16xbf16, #tpu.memory_space<vmem>>, vector<40x16xbf16>
    %cst_12 = arith.constant dense<0.000000e+00> : vector<40x128xf32>
    %15 = tpu.matmul %14, %5, %cst_12 {dimension_numbers = #tpu.dot_dimension_numbers<[1], [0], [0], [1], [0, 0, 1, 1], [], []>} : vector<40x16xbf16>, vector<16x128xbf16>, vector<40x128xf32> -> vector<40x128xf32>
    %c0_13 = arith.constant 0 : index
    %c0_14 = arith.constant 0 : index
    %16 = vector.load %arg6[%c0_13, %c0_14] : memref<40x1xf32, #tpu.memory_space<vmem>>, vector<40x1xf32>
    %17 = vector.broadcast %16 : vector<40x1xf32> to vector<40x128xf32>
    %18 = arith.addf %15, %17 : vector<40x128xf32>
    %19 = vector.extract_strided_slice %18 {offsets = [0, 0], sizes = [32, 128], strides = [1, 1]} : vector<40x128xf32> to vector<32x128xf32>
    %20 = vector.extract_strided_slice %18 {offsets = [32, 0], sizes = [8, 128], strides = [1, 1]} : vector<40x128xf32> to vector<8x128xf32>
    %cst_15 = arith.constant dense<0xFF800000> : vector<8xf32>
    %21 = vector.multi_reduction <maximumf>, %20, %cst_15 [1] : vector<8x128xf32> to vector<8xf32>
    %22 = vector.shape_cast %21 : vector<8xf32> to vector<8x1xf32>
    %c0_16 = arith.constant 0 : index
    %c0_17 = arith.constant 0 : index
    %23 = vector.load %arg9[%c0_16, %c0_17] : memref<8x1xf32, #tpu.memory_space<vmem>>, vector<8x1xf32>
    %24 = arith.maximumf %23, %22 : vector<8x1xf32>
    %c0_18 = arith.constant 0 : index
    %c0_19 = arith.constant 0 : index
    %25 = vector.load %arg9[%c0_18, %c0_19] : memref<8x1xf32, #tpu.memory_space<vmem>>, vector<8x1xf32>
    %26 = arith.subf %25, %24 : vector<8x1xf32>
    %27 = math.exp %26 : vector<8x1xf32>
    %28 = vector.broadcast %24 : vector<8x1xf32> to vector<8x128xf32>
    %29 = arith.subf %20, %28 : vector<8x128xf32>
    %30 = math.exp %29 : vector<8x128xf32>
    %c0_20 = arith.constant 0 : index
    %c0_21 = arith.constant 0 : index
    %31 = vector.load %arg10[%c0_20, %c0_21] : memref<8x1xf32, #tpu.memory_space<vmem>>, vector<8x1xf32>
    %32 = arith.mulf %27, %31 : vector<8x1xf32>
    %cst_22 = arith.constant dense<0.000000e+00> : vector<8xf32>
    %33 = vector.multi_reduction <add>, %30, %cst_22 [1] : vector<8x128xf32> to vector<8xf32>
    %34 = vector.shape_cast %33 : vector<8xf32> to vector<8x1xf32>
    %35 = arith.addf %32, %34 : vector<8x1xf32>
    %c0_23 = arith.constant 0 : index
    %c0_24 = arith.constant 0 : index
    %36 = vector.load %arg10[%c0_23, %c0_24] : memref<8x1xf32, #tpu.memory_space<vmem>>, vector<8x1xf32>
    tpu.vector_store %arg10[%c0_23, %c0_24], %35 {strides = array<i32>} : memref<8x1xf32, #tpu.memory_space<vmem>>, vector<8x1xf32>,
    %c0_25 = arith.constant 0 : index
    %c0_26 = arith.constant 0 : index
    %37 = vector.load %arg9[%c0_25, %c0_26] : memref<8x1xf32, #tpu.memory_space<vmem>>, vector<8x1xf32>
    tpu.vector_store %arg9[%c0_25, %c0_26], %24 {strides = array<i32>} : memref<8x1xf32, #tpu.memory_space<vmem>>, vector<8x1xf32>,
    %38 = arith.truncf %19 : vector<32x128xf32> to vector<32x128xbf16>
    %39 = arith.truncf %30 : vector<8x128xf32> to vector<8x128xbf16>
    %cst_27 = arith.constant dense<0.000000e+00> : vector<32x8xf32>
    %40 = tpu.matmul %38, %39, %cst_27 {dimension_numbers = #tpu.dot_dimension_numbers<[1], [1], [0], [0], [0, 0, 1, 0], [], []>} : vector<32x128xbf16>, vector<8x128xbf16>, vector<32x8xf32> -> vector<32x8xf32>
    %c0_28 = arith.constant 0 : index
    %c0_29 = arith.constant 0 : index
    %41 = vector.load %arg11[%c0_28, %c0_29] : memref<32x8xf32, #tpu.memory_space<vmem>>, vector<32x8xf32>
    %42 = tpu.iota {dimensions = array<i32: 0>} : vector<8x8xi32>
    %43 = tpu.iota {dimensions = array<i32: 1>} : vector<8x8xi32>
    %44 = arith.cmpi eq, %42, %43 : vector<8x8xi32>
    %cst_30 = arith.constant 0.000000e+00 : f32
    %45 = vector.shape_cast %27 : vector<8x1xf32> to vector<8x1xf32>
    %46 = vector.broadcast %45 : vector<8x1xf32> to vector<8x8xf32>
    %47 = vector.broadcast %cst_30 : f32 to vector<8x8xf32>
    %48 = arith.select %44, %46, %47 : vector<8x8xi1>, vector<8x8xf32>
    %cst_31 = arith.constant dense<0.000000e+00> : vector<8xf32>
    %49 = vector.multi_reduction <add>, %48, %cst_31 [0] : vector<8x8xf32> to vector<8xf32>
    %50 = vector.shape_cast %49 : vector<8xf32> to vector<1x8xf32>
    %51 = vector.broadcast %50 : vector<1x8xf32> to vector<32x8xf32>
    %52 = arith.mulf %41, %51 : vector<32x8xf32>
    %53 = arith.addf %52, %40 : vector<32x8xf32>
    %c0_32 = arith.constant 0 : index
    %c0_33 = arith.constant 0 : index
    %54 = vector.load %arg11[%c0_32, %c0_33] : memref<32x8xf32, #tpu.memory_space<vmem>>, vector<32x8xf32>
    tpu.vector_store %arg11[%c0_32, %c0_33], %53 {strides = array<i32>} : memref<32x8xf32, #tpu.memory_space<vmem>>, vector<32x8xf32>,
    %c1_i32 = arith.constant 1 : i32
    %55 = arith.cmpi eq, %arg1, %c1_i32 : i32
    %56 = arith.extui %55 : i1 to i32
    %c0_i32_34 = arith.constant 0 : i32
    %57 = arith.cmpi ne, %56, %c0_i32_34 : i32
    scf.if %57 {
      %c0_35 = arith.constant 0 : index
      %c0_36 = arith.constant 0 : index
      %58 = vector.load %arg10[%c0_35, %c0_36] : memref<8x1xf32, #tpu.memory_space<vmem>>, vector<8x1xf32>
      %59 = tpu.reciprocal %58 {approx = true} : vector<8x1xf32> -> vector<8x1xf32>
      %c0_37 = arith.constant 0 : index
      %c0_38 = arith.constant 0 : index
      %60 = vector.load %arg11[%c0_37, %c0_38] : memref<32x8xf32, #tpu.memory_space<vmem>>, vector<32x8xf32>
      %61 = tpu.iota {dimensions = array<i32: 0>} : vector<8x8xi32>
      %62 = tpu.iota {dimensions = array<i32: 1>} : vector<8x8xi32>
      %63 = arith.cmpi eq, %61, %62 : vector<8x8xi32>
      %cst_39 = arith.constant 0.000000e+00 : f32
      %64 = vector.shape_cast %59 : vector<8x1xf32> to vector<8x1xf32>
      %65 = vector.broadcast %64 : vector<8x1xf32> to vector<8x8xf32>
      %66 = vector.broadcast %cst_39 : f32 to vector<8x8xf32>
      %67 = arith.select %63, %65, %66 : vector<8x8xi1>, vector<8x8xf32>
      %cst_40 = arith.constant dense<0.000000e+00> : vector<8xf32>
      %68 = vector.multi_reduction <add>, %67, %cst_40 [0] : vector<8x8xf32> to vector<8xf32>
      %69 = vector.shape_cast %68 : vector<8xf32> to vector<1x8xf32>
      %70 = vector.broadcast %69 : vector<1x8xf32> to vector<32x8xf32>
      %71 = arith.mulf %60, %70 : vector<32x8xf32>
      %c0_41 = arith.constant 0 : index
      %c0_42 = arith.constant 0 : index
      %c0_43 = arith.constant 0 : index
      %72 = vector.load %arg8[%c0_41, %c0_42, %c0_43] : memref<1x32x8xf32, #tpu.memory_space<vmem>>, vector<1x32x8xf32>
      %73 = vector.shape_cast %72 : vector<1x32x8xf32> to vector<32x8xf32>
      %74 = vector.shape_cast %71 : vector<32x8xf32> to vector<1x32x8xf32>
      tpu.vector_store %arg8[%c0_41, %c0_42, %c0_43], %74 {strides = array<i32>} : memref<1x32x8xf32, #tpu.memory_space<vmem>>, vector<1x32x8xf32>,
    } else {
    }
    return
  }
  func.func @transform_0(%arg0: i32, %arg1: i32) -> (i32, i32, i32) {
    %c0_i32 = arith.constant 0 : i32
    %c0_i32_0 = arith.constant 0 : i32
    return %arg0, %c0_i32, %arg1 : i32, i32, i32
  }
  func.func @transform_1(%arg0: i32, %arg1: i32) -> (i32, i32) {
    %c0_i32 = arith.constant 0 : i32
    %c0_i32_0 = arith.constant 0 : i32
    %c0_i32_1 = arith.constant 0 : i32
    return %c0_i32, %c0_i32_0 : i32, i32
  }
  func.func @transform_2(%arg0: i32, %arg1: i32) -> (i32, i32) {
    %c0_i32 = arith.constant 0 : i32
    %c0_i32_0 = arith.constant 0 : i32
    %c0_i32_1 = arith.constant 0 : i32
    return %c0_i32, %c0_i32_0 : i32, i32
  }
  func.func @transform_3(%arg0: i32, %arg1: i32) -> (i32, i32) {
    %c0_i32 = arith.constant 0 : i32
    %c0_i32_0 = arith.constant 0 : i32
    %c0_i32_1 = arith.constant 0 : i32
    return %c0_i32, %c0_i32_0 : i32, i32
  }
  func.func @transform_4(%arg0: i32, %arg1: i32) -> (i32, i32) {
    %c0_i32 = arith.constant 0 : i32
    %c0_i32_0 = arith.constant 0 : i32
    %c0_i32_1 = arith.constant 0 : i32
    return %c0_i32, %c0_i32_0 : i32, i32
  }
  func.func @transform_5(%arg0: i32, %arg1: i32) -> (i32, i32, i32) {
    %c0_i32 = arith.constant 0 : i32
    %c0_i32_0 = arith.constant 0 : i32
    return %arg0, %c0_i32, %arg1 : i32, i32, i32
  }
  func.func @transform_6(%arg0: i32, %arg1: i32) -> (i32, i32, i32) {
    %c0_i32 = arith.constant 0 : i32
    %c0_i32_0 = arith.constant 0 : i32
    %c0_i32_1 = arith.constant 0 : i32
    return %arg0, %c0_i32, %c0_i32_0 : i32, i32, i32
  }
}

</mosaic_0001>

<llo_original>
// kernel: conv_tokenizer_forward.1
$region0: #{conv_tokenizer_forward.1}
  #allocation0 [shape = 'u32[]', space=smem, size = 0x4, offset = 0x4, fixed_abs, tag = 'smem constant byte address 0x4 - core index']
  #allocation1 [shape = 'u32[144,128]{1,0:T(1,128)}', space=vmem, size = 0x12000, scoped, tag = 'internal scratch']
  #allocation2 [shape = 'f32[8,1]{1,0:T(8,128)}', space=vmem, size = 0x1000, scoped, tag = 'scratch operand']
  #allocation3 [shape = 'f32[8,1]{1,0:T(8,128)}', space=vmem, size = 0x1000, scoped, tag = 'scratch operand']
  #allocation4 [shape = 'f32[32,8]{1,0:T(8,128)}', space=vmem, size = 0x4000, scoped, tag = 'scratch operand']
  %s0 = inlined_call_operand.vmem [shape: f32[2,16,256], index: 0, kind: input, shape index: {}]
  %s1 = inlined_call_operand.vmem [shape: bf16[32,16], index: 1, kind: input, shape index: {}]
  %s2 = inlined_call_operand.vmem [shape: f32[32,1], index: 2, kind: input, shape index: {}]
  %s3 = inlined_call_operand.vmem [shape: bf16[40,16], index: 3, kind: input, shape index: {}]
  %s4 = inlined_call_operand.vmem [shape: f32[40,1], index: 4, kind: input, shape index: {}]
  %s5 = inlined_call_operand.vmem [shape: f32[2,32,256], index: 5, kind: output, shape index: {0}]
  %s6 = inlined_call_operand.vmem [shape: f32[2,32,8], index: 6, kind: output, shape index: {1}]
  %7 = xla_tuple %s5, %s6
  %s8 = sld [smem:[#allocation0]]
  $region141: #{conv_tokenizer_forward.1} parent=0
    _
  %s10 = ssub.s32 1, %s8
  %s11 = scalar_select 0, %s10, %s8
  $region1: #{conv_tokenizer_forward.1} parent=0
    #allocation5 [shape = 'u8[16384]{0}', space=vmem, size = 0x4000, scoped, tag = 'input window, operand 0']
    #allocation6 [shape = 'u8[32768]{0}', space=vmem, size = 0x8000, scoped, tag = 'output window, operand 0']
    loop: start=0, step=1, limit=6
    $region2: #{conv_tokenizer_forward.1} parent=1 // loop_pre_header
      _
    $region3: #{conv_tokenizer_forward.1} parent=1 // loop_header
      %s13 = sphi 0, %s17
      %p14 = scmp.ge.s32.totalorder %s13, 6
      %s20 = sphi 0, %s32
      %s21 = sphi 0, %s28
      %s22 = sphi 0, %s20
      %s23 = sphi 0, %s21
      %s24 = sphi 0, %s22
      %s25 = sphi 0, %s23
      %s37 = sphi 0, %s39
      %s40 = sphi 0, %s37
      %s41 = sphi 0, %s40
      %s57 = sphi 0, %s41
      %s61 = sphi 0, %s61
      %s63 = sphi 0, %s61
      %s64 = sphi 0, %s63
      %s78 = sphi 0, %s64
      %s82 = sphi 0, %s82
      %s84 = sphi 0, %s82
      %s85 = sphi 0, %s84
      %s99 = sphi 0, %s85
      %s103 = sphi 0, %s103
      %s105 = sphi 0, %s103
      %s106 = sphi 0, %s105
      %s120 = sphi 0, %s106
      %s124 = sphi 0, %s124
      %s126 = sphi 0, %s124
      %s127 = sphi 0, %s126
      %s141 = sphi 0, %s127
      %s149 = sphi 0, %s151
      %s152 = sphi 0, %s149
      %s153 = sphi 0, %s152
      %s169 = sphi 0, %s153
      %s175 = sphi 0, %s177
      %s178 = sphi 0, %s175
      %s179 = sphi 0, %s178
      %s195 = sphi 0, %s179
    $region4: #{conv_tokenizer_forward.1} parent=1 // loop_header_branch
      %16 = sbr.rel (%p14) target = $region8
    $region5: #{conv_tokenizer_forward.1} parent=1 // loop_body
      %s18 = ssub.s32 %s13, 1
      %s19 = ssub.s32 %s13, 2
      %s26 = sadd.s32 1, %s21
      %p27 = scmp.ge.s32.totalorder %s26, 2
      %s28 = scalar_select %p27, 0, %s26
      %s29 = sadd.s32 1, %s20
      %s30 = scalar_select %p27, %s29, %s20
      %p31 = scmp.ge.s32.totalorder %s30, 2
      %s32 = scalar_select %p31, 0, %s30
      %s33 = ssub.s32 %s20, %s32
      %s34 = ssub.s32 %s21, %s28
      %s35 = sor.u32 %s33, %s34
      %p36 = scmp.eq.s32.totalorder %s35, 0
      %s38 = sadd.s32 %s37, 1
      %s39 = scalar_select %p36, %s37, %s38
      %p42 = pneg %p36
      %p43 = scmp.eq.s32.totalorder %s13, 3
      %p44 = por %p42, %p43
      %p45 = scmp.ne.s32.totalorder %s37, %s40
      %p46 = scmp.eq.s32.totalorder %s13, 0
      %p47 = por %p45, %p46
      %p48 = scmp.ne.s32.totalorder %s37, %s40
      %p49 = scmp.eq.s32.totalorder %s18, 3
      %p50 = por %p48, %p49
      %p51 = scmp.ne.s32.totalorder %s40, %s41
      %p52 = scmp.eq.s32.totalorder %s18, 0
      %p53 = por %p51, %p52
      %p54 = scmp.ne.s32.totalorder %s40, %s41
      %p55 = scmp.eq.s32.totalorder %s19, 3
      %p56 = por %p54, %p55
      %p58 = scmp.ne.s32.totalorder %s41, %s57
      %p59 = scmp.eq.s32.totalorder %s19, 0
      %p60 = por %p58, %p59
      %s62 = sadd.s32 %s61, 1
      %p65 = scmp.eq.s32.totalorder %s13, 3
      %p66 = scmp.ne.s32.totalorder %s61, %s63
      %p67 = scmp.eq.s32.totalorder %s13, 0
      %p68 = por %p66, %p67
      %p69 = scmp.ne.s32.totalorder %s61, %s63
      %p70 = scmp.eq.s32.totalorder %s18, 3
      %p71 = por %p69, %p70
      %p72 = scmp.ne.s32.totalorder %s63, %s64
      %p73 = scmp.eq.s32.totalorder %s18, 0
      %p74 = por %p72, %p73
      %p75 = scmp.ne.s32.totalorder %s63, %s64
      %p76 = scmp.eq.s32.totalorder %s19, 3
      %p77 = por %p75, %p76
      %p79 = scmp.ne.s32.totalorder %s64, %s78
      %p80 = scmp.eq.s32.totalorder %s19, 0
      %p81 = por %p79, %p80
      %s83 = sadd.s32 %s82, 1
      %p86 = scmp.eq.s32.totalorder %s13, 3
      %p87 = scmp.ne.s32.totalorder %s82, %s84
      %p88 = scmp.eq.s32.totalorder %s13, 0
      %p89 = por %p87, %p88
      %p90 = scmp.ne.s32.totalorder %s82, %s84
      %p91 = scmp.eq.s32.totalorder %s18, 3
      %p92 = por %p90, %p91
      %p93 = scmp.ne.s32.totalorder %s84, %s85
      %p94 = scmp.eq.s32.totalorder %s18, 0
      %p95 = por %p93, %p94
      %p96 = scmp.ne.s32.totalorder %s84, %s85
      %p97 = scmp.eq.s32.totalorder %s19, 3
      %p98 = por %p96, %p97
      %p100 = scmp.ne.s32.totalorder %s85, %s99
      %p101 = scmp.eq.s32.totalorder %s19, 0
      %p102 = por %p100, %p101
      %s104 = sadd.s32 %s103, 1
      %p107 = scmp.eq.s32.totalorder %s13, 3
      %p108 = scmp.ne.s32.totalorder %s103, %s105
      %p109 = scmp.eq.s32.totalorder %s13, 0
      %p110 = por %p108, %p109
      %p111 = scmp.ne.s32.totalorder %s103, %s105
      %p112 = scmp.eq.s32.totalorder %s18, 3
      %p113 = por %p111, %p112
      %p114 = scmp.ne.s32.totalorder %s105, %s106
      %p115 = scmp.eq.s32.totalorder %s18, 0
      %p116 = por %p114, %p115
      %p117 = scmp.ne.s32.totalorder %s105, %s106
      %p118 = scmp.eq.s32.totalorder %s19, 3
      %p119 = por %p117, %p118
      %p121 = scmp.ne.s32.totalorder %s106, %s120
      %p122 = scmp.eq.s32.totalorder %s19, 0
      %p123 = por %p121, %p122
      %s125 = sadd.s32 %s124, 1
      %p128 = scmp.eq.s32.totalorder %s13, 3
      %p129 = scmp.ne.s32.totalorder %s124, %s126
      %p130 = scmp.eq.s32.totalorder %s13, 0
      %p131 = por %p129, %p130
      %p132 = scmp.ne.s32.totalorder %s124, %s126
      %p133 = scmp.eq.s32.totalorder %s18, 3
      %p134 = por %p132, %p133
      %p135 = scmp.ne.s32.totalorder %s126, %s127
      %p136 = scmp.eq.s32.totalorder %s18, 0
      %p137 = por %p135, %p136
      %p138 = scmp.ne.s32.totalorder %s126, %s127
      %p139 = scmp.eq.s32.totalorder %s19, 3
      %p140 = por %p138, %p139
      %p142 = scmp.ne.s32.totalorder %s127, %s141
      %p143 = scmp.eq.s32.totalorder %s19, 0
      %p144 = por %p142, %p143
      %s145 = ssub.s32 %s20, %s32
      %s146 = ssub.s32 %s21, %s28
      %s147 = sor.u32 %s145, %s146
      %p148 = scmp.eq.s32.totalorder %s147, 0
      %s150 = sadd.s32 %s149, 1
      %s151 = scalar_select %p148, %s149, %s150
      %p154 = pneg %p148
      %p155 = scmp.eq.s32.totalorder %s13, 3
      %p156 = por %p154, %p155
      %p157 = scmp.ne.s32.totalorder %s149, %s152
      %p158 = scmp.eq.s32.totalorder %s13, 0
      %p159 = por %p157, %p158
      %p160 = scmp.ne.s32.totalorder %s149, %s152
      %p161 = scmp.eq.s32.totalorder %s18, 3
      %p162 = por %p160, %p161
      %p163 = scmp.ne.s32.totalorder %s152, %s153
      %p164 = scmp.eq.s32.totalorder %s18, 0
      %p165 = por %p163, %p164
      %p166 = scmp.ne.s32.totalorder %s152, %s153
      %p167 = scmp.eq.s32.totalorder %s19, 3
      %p168 = por %p166, %p167
      %p170 = scmp.ne.s32.totalorder %s153, %s169
      %p171 = scmp.eq.s32.totalorder %s19, 0
      %p172 = por %p170, %p171
      %s173 = ssub.s32 %s20, %s32
      %p174 = scmp.eq.s32.totalorder %s173, 0
      %s176 = sadd.s32 %s175, 1
      %s177 = scalar_select %p174, %s175, %s176
      %p180 = pneg %p174
      %p181 = scmp.eq.s32.totalorder %s13, 3
      %p182 = por %p180, %p181
      %p183 = scmp.ne.s32.totalorder %s175, %s178
      %p184 = scmp.eq.s32.totalorder %s13, 0
      %p185 = por %p183, %p184
      %p186 = scmp.ne.s32.totalorder %s175, %s178
      %p187 = scmp.eq.s32.totalorder %s18, 3
      %p188 = por %p186, %p187
      %p189 = scmp.ne.s32.totalorder %s178, %s179
      %p190 = scmp.eq.s32.totalorder %s18, 0
      %p191 = por %p189, %p190
      %p192 = scmp.ne.s32.totalorder %s178, %s179
      %p193 = scmp.eq.s32.totalorder %s19, 3
      %p194 = por %p192, %p193
      %p196 = scmp.ne.s32.totalorder %s179, %s195
      %p197 = scmp.eq.s32.totalorder %s19, 0
      %p198 = por %p196, %p197
      %p199 = scmp.le.s32.totalorder 1, %s13
      %p200 = scmp.lt.s32.totalorder %s13, 5
      %p201 = pnand %p199, %p200
      %p202 = pneg %p201
      // Predicated region
      $region9: #{conv_tokenizer_forward.1} parent=5 // pred_check
        _
      $region10: #{conv_tokenizer_forward.1} parent=5 // pred_check_branch
        %204 = sbr.rel (%p201) target = $region12
      $region11: #{conv_tokenizer_forward.1} parent=5 // pred_region
        %s205 = ssub.s32 %s13, 1
        // Predicated region
        $region13: #{conv_tokenizer_forward.1} parent=11 // pred_check
          %p206 = pneg %p74
        $region14: #{conv_tokenizer_forward.1} parent=11 // pred_check_branch
          %208 = sbr.rel (%p206) target = $region16
        $region15: #{conv_tokenizer_forward.1} parent=11 // pred_region
          _
        $region16: #{conv_tokenizer_forward.1} parent=11 // pred_fallthru
          _
        // Predicated region
        $region17: #{conv_tokenizer_forward.1} parent=11 // pred_check
          %p209 = pneg %p95
        $region18: #{conv_tokenizer_forward.1} parent=11 // pred_check_branch
          %211 = sbr.rel (%p209) target = $region20
        $region19: #{conv_tokenizer_forward.1} parent=11 // pred_region
          _
        $region20: #{conv_tokenizer_forward.1} parent=11 // pred_fallthru
          _
        // Predicated region
        $region21: #{conv_tokenizer_forward.1} parent=11 // pred_check
          %p212 = pneg %p116
        $region22: #{conv_tokenizer_forward.1} parent=11 // pred_check_branch
          %214 = sbr.rel (%p212) target = $region24
        $region23: #{conv_tokenizer_forward.1} parent=11 // pred_region
          _
        $region24: #{conv_tokenizer_forward.1} parent=11 // pred_fallthru
          _
        // Predicated region
        $region25: #{conv_tokenizer_forward.1} parent=11 // pred_check
          %p215 = pneg %p137
        $region26: #{conv_tokenizer_forward.1} parent=11 // pred_check_branch
          %217 = sbr.rel (%p215) target = $region28
        $region27: #{conv_tokenizer_forward.1} parent=11 // pred_region
          _
        $region28: #{conv_tokenizer_forward.1} parent=11 // pred_fallthru
          _
      $region12: #{conv_tokenizer_forward.1} parent=5 // pred_fallthru
        _
      %p218 = scmp.lt.s32.totalorder %s13, 4
      // Predicated region
      $region29: #{conv_tokenizer_forward.1} parent=5 // pred_check
        %p219 = pneg %p218
      $region30: #{conv_tokenizer_forward.1} parent=5 // pred_check_branch
        %221 = sbr.rel (%p219) target = $region32
      $region31: #{conv_tokenizer_forward.1} parent=5 // pred_region
        // Predicated region
        $region33: #{conv_tokenizer_forward.1} parent=31 // pred_check
          %p222 = pneg %p47
        $region34: #{conv_tokenizer_forward.1} parent=31 // pred_check_branch
          %224 = sbr.rel (%p222) target = $region36
        $region35: #{conv_tokenizer_forward.1} parent=31 // pred_region
          %s225 = sand.u32 %s37, 1
          %s226 = sand.u32 %s37, 1
          %s227 = smul.addr %s226, 16
          %s228 = scalar_lea.vmem [#allocation5], %s227
          %s229 = smul.addr %s20, 4
          %s230 = sadd.s32 %s21, %s229
          %s231 = smul.addr %s230, 8
          %s232 = scalar_lea.vmem %s0, %s231
          // Predicated region
          $region37: #{conv_tokenizer_forward.1} parent=35 // pred_check
            _
          $region38: #{conv_tokenizer_forward.1} parent=35 // pred_check_branch
            %234 = sbr.rel (0) target = $region40
          $region39: #{conv_tokenizer_forward.1} parent=35 // pred_region
            // Predicated region
            $region41: #{conv_tokenizer_forward.1} parent=39 // pred_check
              _
            $region42: #{conv_tokenizer_forward.1} parent=39 // pred_check_branch
              %236 = sbr.rel (0) target = $region44
            $region43: #{conv_tokenizer_forward.1} parent=39 // pred_region
              // Predicated region
              $region56: #{conv_tokenizer_forward.1} parent=43 // pred_check
                _
              $region57: #{conv_tokenizer_forward.1} parent=43 // pred_check_branch
                %254 = sbr.rel (0) target = $region59
              $region58: #{conv_tokenizer_forward.1} parent=43 // pred_region
                loop: start=0, step=1, limit=1
                $region60: #{conv_tokenizer_forward.1} parent=58 // loop_pre_header
                  _
                $region61: #{conv_tokenizer_forward.1} parent=58 // loop_header
                  %s256 = sphi 0, %s260
                  %p257 = scmp.ge.s32.totalorder %s256, 1
                  %s261 = sphi %s232, %s232
                  %s262 = sphi %s228, %s228
                $region62: #{conv_tokenizer_forward.1} parent=58 // loop_header_branch
                  %259 = sbr.rel (%p257) target = $region66
                $region63: #{conv_tokenizer_forward.1} parent=58 // loop_body
                  %v263 = vld [vmem:[%s261] sm:$0xff]
                  %264 = vst [vmem:[%s262] sm:$0xff] %v263
                  %v265 = vld [vmem:[%s261 + $0x10] sm:$0xff]
                  %266 = vst [vmem:[%s262 + $0x8] sm:$0xff] %v265
                $region64: #{conv_tokenizer_forward.1} parent=58 // loop_footer
                  %s260 = sadd.s32 1, %s256
                $region65: #{conv_tokenizer_forward.1} parent=58 // loop_footer_branch
                  %255 = sbr.rel target = $region61
                $region66: #{conv_tokenizer_forward.1} parent=58 // loop_exit
                  _
              $region59: #{conv_tokenizer_forward.1} parent=43 // pred_fallthru
                _
              // Predicated region
              $region67: #{conv_tokenizer_forward.1} parent=43 // pred_check
                _
              $region68: #{conv_tokenizer_forward.1} parent=43 // pred_check_branch
                %268 = sbr.rel target = $region70
              $region69: #{conv_tokenizer_forward.1} parent=43 // pred_region
                _
              $region70: #{conv_tokenizer_forward.1} parent=43 // pred_fallthru
                _
            $region44: #{conv_tokenizer_forward.1} parent=39 // pred_fallthru
              _
            // Predicated region
            $region45: #{conv_tokenizer_forward.1} parent=39 // pred_check
              _
            $region46: #{conv_tokenizer_forward.1} parent=39 // pred_check_branch
              %238 = sbr.rel target = $region48
            $region47: #{conv_tokenizer_forward.1} parent=39 // pred_region
              %s240 = ssub.s32 256, 1
              loop: start=0, step=1, limit=1
              $region49: #{conv_tokenizer_forward.1} parent=47 // loop_pre_header
                _
              $region50: #{conv_tokenizer_forward.1} parent=47 // loop_header
                %s242 = sphi 0, %s246
                %p243 = scmp.ge.s32.totalorder %s242, 1
                %s247 = sphi %s232, %s232
                %s248 = sphi %s228, %s228
              $region51: #{conv_tokenizer_forward.1} parent=47 // loop_header_branch
                %245 = sbr.rel (%p243) target = $region55
              $region52: #{conv_tokenizer_forward.1} parent=47 // loop_body
                %v249 = vld [vmem:[%s247] sm:%s240]
                %250 = vst [vmem:[%s248] sm:%s240] %v249
                %v251 = vld [vmem:[%s247 + $0x10] sm:%s240]
                %252 = vst [vmem:[%s248 + $0x8] sm:%s240] %v251
              $region53: #{conv_tokenizer_forward.1} parent=47 // loop_footer
                %s246 = sadd.s32 1, %s242
              $region54: #{conv_tokenizer_forward.1} parent=47 // loop_footer_branch
                %241 = sbr.rel target = $region50
              $region55: #{conv_tokenizer_forward.1} parent=47 // loop_exit
                _
            $region48: #{conv_tokenizer_forward.1} parent=39 // pred_fallthru
              _
          $region40: #{conv_tokenizer_forward.1} parent=35 // pred_fallthru
            _
          %269 = vnop
        $region36: #{conv_tokenizer_forward.1} parent=31 // pred_fallthru
          _
      $region32: #{conv_tokenizer_forward.1} parent=5 // pred_fallthru
        _
      %p270 = scmp.le.s32.totalorder 1, %s13
      %p271 = scmp.lt.s32.totalorder %s13, 5
      %p272 = pnand %p270, %p271
      %p273 = pneg %p272
      // Predicated region
      $region71: #{conv_tokenizer_forward.1} parent=5 // pred_check
        _
      $region72: #{conv_tokenizer_forward.1} parent=5 // pred_check_branch
        %275 = sbr.rel (%p272) target = $region74
      $region73: #{conv_tokenizer_forward.1} parent=5 // pred_region
        %s276 = ssub.s32 %s13, 1
        %s277 = sand.u32 %s40, 1
        %s278 = sand.u32 %s40, 1
        %s279 = smul.addr %s278, 16
        %s280 = scalar_lea.vmem [#allocation5], %s279
        // Predicated region
        $region75: #{conv_tokenizer_forward.1} parent=73 // pred_check
          %p281 = pneg %p53
        $region76: #{conv_tokenizer_forward.1} parent=73 // pred_check_branch
          %283 = sbr.rel (%p281) target = $region78
        $region77: #{conv_tokenizer_forward.1} parent=73 // pred_region
          _
        $region78: #{conv_tokenizer_forward.1} parent=73 // pred_fallthru
          _
        %s284 = sand.u32 %s40, 1
        %s285 = sand.u32 %s40, 1
        %s286 = smul.addr %s285, 16
        %s287 = scalar_lea.vmem [#allocation5], %s286
        %p288 = pneg %p53
        %p289 = pneg %p50
        %p290 = pneg %p74
        %p291 = pneg %p71
        %p292 = pneg %p95
        %p293 = pneg %p92
        %p294 = pneg %p116
        %p295 = pneg %p113
        %p296 = pneg %p137
        %p297 = pneg %p134
        %p298 = pneg %p165
        %p299 = pneg %p162
        %s300 = sand.u32 %s152, 1
        %s301 = sand.u32 %s152, 1
        %s302 = smul.addr %s301, 32
        %s303 = scalar_lea.vmem [#allocation6], %s302
        %p304 = pneg %p191
        %p305 = pneg %p188
        %p306 = scmp.lt.s32.totalorder %s22, 1
        %s307 = scalar_select %p306, %s22, 1
        %s308 = smul.addr %s307, 4
        %s309 = smul.addr %s308, 8
        %s310 = scalar_lea.vmem %s6, %s309
        %p311 = scmp.lt.s32.totalorder %s22, 1
        %s312 = scalar_select %p311, %s22, 1
        %s313 = smul.addr %s312, 4
        %s314 = smul.addr %s313, 8
        %s315 = scalar_lea.vmem %s6, %s314
        %p317 = scmp.eq.s32.totalorder %s23, 0
        // Predicated region
        $region79: #{conv_tokenizer_forward.1} parent=73 // pred_check
          %p318 = pneg %p317
        $region80: #{conv_tokenizer_forward.1} parent=73 // pred_check_branch
          %320 = sbr.rel (%p318) target = $region82
        $region81: #{conv_tokenizer_forward.1} parent=73 // pred_region
          %vm321 = vcmask 7168
          %322 = vst.msk [vmem:[#allocation2] sm:$0xff] %vm321, -inf
          %323 = vst.msk [vmem:[#allocation3] sm:$0xff] %vm321, 0.0
          %vm324 = vcmask 64512
          %325 = vst.msk [vmem:[#allocation4] sm:$0xff] %vm324, 0.0
          %326 = vst.msk [vmem:[#allocation4 + $0x8] sm:$0xff] %vm324, 0.0
          %327 = vst.msk [vmem:[#allocation4 + $0x10] sm:$0xff] %vm324, 0.0
          %328 = vst.msk [vmem:[#allocation4 + $0x18] sm:$0xff] %vm324, 0.0
        $region82: #{conv_tokenizer_forward.1} parent=73 // pred_fallthru
          _
        %v329 = vld [vmem:[%s280] sm:$0xff]
        %v330 = vld [vmem:[%s280 + $0x8] sm:$0xff]
        %v331 = vpack.c.bf16 %v330, %v329
        %v332 = vld [vmem:[%s1] sm:$0xf]
        %v333 = vld [vmem:[%s1 + $0x4] sm:$0xf]
        %v334 = vld [vmem:[%s1 + $0x8] sm:$0xf]
        %v335 = vld [vmem:[%s1 + $0xc] sm:$0xf]
        %v336 = vld [vmem:[%s2] sm:$0xff]
        %v337 = vld [vmem:[%s2 + $0x8] sm:$0xff]
        %v338 = vld [vmem:[%s2 + $0x10] sm:$0xff]
        %v339 = vld [vmem:[%s2 + $0x18] sm:$0xff]
        %341 = vset.pattern.permute.xlu0 0
        %342 = vperm.xlu0 %341, %v336
        %v343 = vpop.permute.xlu0 %342
        %346 = vset.pattern.permute.xlu0 0
        %347 = vperm.xlu0 %346, %v337
        %v348 = vpop.permute.xlu0 %347
        %351 = vset.pattern.permute.xlu0 0
        %352 = vperm.xlu0 %351, %v338
        %v353 = vpop.permute.xlu0 %352
        %356 = vset.pattern.permute.xlu0 0
        %357 = vperm.xlu0 %356, %v339
        %v358 = vpop.permute.xlu0 %357
        %v364 = vunpack.c.l.b16 %v332
        %v365 = vunpack.c.l.b16 %v333
        %v366 = vunpack.c.l.b16 %v334
        %v367 = vunpack.c.l.b16 %v335
        %v368 = vpack.c.b16 %v365, %v364
        %v369 = vpack.c.b16 %v367, %v366
        %vm370 = vcmask 130048
        %v372 = vsel %vm370, %v368, 0
        %v375 = vsel %vm370, %v369, 0
        %377 = vmatprep.subr.bf16.mxu0 0
        %378 = vmatpush1.bf16.msra.mxu0 0
        %379 = vmatprep.subr.bf16.mxu0 0
        %380 = vmatpush1.bf16.msra.mxu0 0
        %381 = vmatprep.subr.bf16.mxu0 0
        %382 = vmatpush1.bf16.msra.mxu0 0
        %383 = vmatprep.subr.bf16.mxu0 0
        %384 = vmatpush1.bf16.msra.mxu0 0
        %385 = vmatprep.subr.bf16.mxu0 0
        %386 = vmatpush1.bf16.msra.mxu0 0
        %387 = vmatprep.subr.bf16.mxu0 0
        %388 = vmatpush1.bf16.msra.mxu0 0
        %389 = vmatprep.subr.bf16.mxu0 0
        %390 = vmatpush1.bf16.msra.mxu0 0
        %391 = vmatprep.subr.bf16.mxu0 0
        %392 = vmatpush1.bf16.msra.mxu0 %v331
        %393 = vmatprep.subr.bf16.mxu0 0
        %394 = vmatpush2.bf16.msra.mxu0 0
        %395 = vmatprep.subr.bf16.mxu0 0
        %396 = vmatpush2.bf16.msra.mxu0 0
        %397 = vmatprep.subr.bf16.mxu0 0
        %398 = vmatpush2.bf16.msra.mxu0 0
        %399 = vmatprep.subr.bf16.mxu0 0
        %400 = vmatpush2.bf16.msra.mxu0 0
        %401 = vmatprep.subr.bf16.mxu0 0
        %402 = vmatpush2.bf16.msra.mxu0 0
        %403 = vmatprep.subr.bf16.mxu0 0
        %404 = vmatpush2.bf16.msra.mxu0 0
        %405 = vmatprep.subr.bf16.mxu0 0
        %406 = vmatpush2.bf16.msra.mxu0 0
        %407 = vmatprep.subr.bf16.mxu0 0
        %408 = vmatpush2.bf16.msra.mxu0 0
        %409 = vmatprep.mubr.bf16.mxu0 0
        %410 = vmatmul.mubr.bf16.gmra.mxu0 %v372
        %v411 = vpop.f32.mrf.mxu0
        %v412 = vadd.f32 %v343, %v411
        %v413 = vpop.f32.mrf.mxu0
        %v414 = vpop.f32.mrf.mxu0
        %v415 = vadd.f32 %v348, %v414
        %v416 = vpop.f32.mrf.mxu0
        %417 = vmatprep.mubr.bf16.mxu0 0
        %418 = vmatmul.mubr.bf16.gmra.mxu0 %v375
        %v419 = vpop.f32.mrf.mxu0
        %v420 = vadd.f32 %v353, %v419
        %v421 = vpop.f32.mrf.mxu0
        %v422 = vpop.f32.mrf.mxu0
        %v423 = vadd.f32 %v358, %v422
        %v424 = vpop.f32.mrf.mxu0
        %425 = vdwg.mxu0
        %426 = vst [vmem:[%s303] sm:$0xff] %v412
        %427 = vst [vmem:[%s303 + $0x8] sm:$0xff] %v415
        %428 = vst [vmem:[%s303 + $0x10] sm:$0xff] %v420
        %429 = vst [vmem:[%s303 + $0x18] sm:$0xff] %v423
        %v430 = vld [vmem:[%s3] sm:$0xf]
        %v431 = vld [vmem:[%s3 + $0x4] sm:$0xf]
        %v432 = vld [vmem:[%s3 + $0x8] sm:$0xf]
        %v433 = vld [vmem:[%s3 + $0xc] sm:$0xf]
        %v434 = vld [vmem:[%s3 + $0x10] sm:$0xf]
        %v435 = vld [vmem:[%s4] sm:$0xff]
        %v436 = vld [vmem:[%s4 + $0x8] sm:$0xff]
        %v437 = vld [vmem:[%s4 + $0x10] sm:$0xff]
        %v438 = vld [vmem:[%s4 + $0x18] sm:$0xff]
        %v439 = vld [vmem:[%s4 + $0x20] sm:$0xff]
        %441 = vset.pattern.permute.xlu0 0
        %442 = vperm.xlu0 %441, %v435
        %v443 = vpop.permute.xlu0 %442
        %446 = vset.pattern.permute.xlu0 0
        %447 = vperm.xlu0 %446, %v436
        %v448 = vpop.permute.xlu0 %447
        %451 = vset.pattern.permute.xlu0 0
        %452 = vperm.xlu0 %451, %v437
        %v453 = vpop.permute.xlu0 %452
        %456 = vset.pattern.permute.xlu0 0
        %457 = vperm.xlu0 %456, %v438
        %v458 = vpop.permute.xlu0 %457
        %461 = vset.pattern.permute.xlu0 0
        %462 = vperm.xlu0 %461, %v439
        %v463 = vpop.permute.xlu0 %462
        %v470 = vunpack.c.l.b16 %v430
        %v471 = vunpack.c.l.b16 %v431
        %v472 = vunpack.c.l.b16 %v432
        %v473 = vunpack.c.l.b16 %v433
        %v474 = vunpack.c.l.b16 %v434
        %v475 = vpack.c.b16 %v471, %v470
        %v476 = vpack.c.b16 %v473, %v472
        %v477 = vpack.c.b16 %v474, %v474
        %v479 = vsel %vm370, %v475, 0
        %v482 = vsel %vm370, %v476, 0
        %v485 = vsel %vm370, %v477, 0
        %487 = vmatprep.subr.bf16.mxu0 0
        %488 = vmatpush1.bf16.msra.mxu0 0
        %489 = vmatprep.subr.bf16.mxu0 0
        %490 = vmatpush1.bf16.msra.mxu0 0
        %491 = vmatprep.subr.bf16.mxu0 0
        %492 = vmatpush1.bf16.msra.mxu0 0
        %493 = vmatprep.subr.bf16.mxu0 0
        %494 = vmatpush1.bf16.msra.mxu0 0
        %495 = vmatprep.subr.bf16.mxu0 0
        %496 = vmatpush1.bf16.msra.mxu0 0
        %497 = vmatprep.subr.bf16.mxu0 0
        %498 = vmatpush1.bf16.msra.mxu0 0
        %499 = vmatprep.subr.bf16.mxu0 0
        %500 = vmatpush1.bf16.msra.mxu0 0
        %501 = vmatprep.subr.bf16.mxu0 0
        %502 = vmatpush1.bf16.msra.mxu0 %v331
        %503 = vmatprep.subr.bf16.mxu0 0
        %504 = vmatpush2.bf16.msra.mxu0 0
        %505 = vmatprep.subr.bf16.mxu0 0
        %506 = vmatpush2.bf16.msra.mxu0 0
        %507 = vmatprep.subr.bf16.mxu0 0
        %508 = vmatpush2.bf16.msra.mxu0 0
        %509 = vmatprep.subr.bf16.mxu0 0
        %510 = vmatpush2.bf16.msra.mxu0 0
        %511 = vmatprep.subr.bf16.mxu0 0
        %512 = vmatpush2.bf16.msra.mxu0 0
        %513 = vmatprep.subr.bf16.mxu0 0
        %514 = vmatpush2.bf16.msra.mxu0 0
        %515 = vmatprep.subr.bf16.mxu0 0
        %516 = vmatpush2.bf16.msra.mxu0 0
        %517 = vmatprep.subr.bf16.mxu0 0
        %518 = vmatpush2.bf16.msra.mxu0 0
        %519 = vmatprep.mubr.bf16.mxu0 0
        %520 = vmatmul.mubr.bf16.gmra.mxu0 %v479
        %v521 = vpop.f32.mrf.mxu0
        %v522 = vadd.f32 %v443, %v521
        %v523 = vpop.f32.mrf.mxu0
        %v524 = vpop.f32.mrf.mxu0
        %v525 = vadd.f32 %v448, %v524
        %v526 = vpop.f32.mrf.mxu0
        %527 = vmatprep.mubr.bf16.mxu0 0
        %528 = vmatmul.mubr.bf16.gmra.mxu0 %v482
        %v529 = vpop.f32.mrf.mxu0
        %v530 = vadd.f32 %v453, %v529
        %v531 = vpop.f32.mrf.mxu0
        %v532 = vpop.f32.mrf.mxu0
        %v533 = vadd.f32 %v458, %v532
        %v534 = vpop.f32.mrf.mxu0
        %535 = vmatprep.mubr.bf16.mxu0 0
        %536 = vmatmul.mubr.bf16.gmra.mxu0 %v485
        %v537 = vpop.f32.mrf.mxu0
        %v538 = vadd.f32 %v463, %v537
        %v539 = vpop.f32.mrf.mxu0
        %v540 = vpop.f32.mrf.mxu0
        %v541 = vpop.f32.mrf.mxu0
        %542 = vdwg.mxu0
        %543 = vmax.xlane.f32.xlu0 %v538
        %v544 = vpop.xlane.xlu0 %543
        %v545 = vld [vmem:[#allocation2] sm:$0xff]
        %v546 = vmax.f32 %v545, %v544
        %v547 = vsub.f32 %v545, %v546
        %v548 = vmul.f32 %v547, 1.442695
        %v549 = vpow.pop %v548
        %551 = vset.pattern.permute.xlu0 0
        %552 = vperm.xlu0 %551, %v546
        %v553 = vpop.permute.xlu0 %552
        %v555 = vsub.f32 %v538, %v553
        %v556 = vmul.f32 %v555, 1.442695
        %v557 = vpow.pop %v556
        %v558 = vld [vmem:[#allocation3] sm:$0xff]
        %v559 = vmul.f32 %v549, %v558
        %560 = vadd.xlane.f32.xlu0 %v557
        %v561 = vpop.xlane.xlu0 %560
        %v562 = vadd.f32 %v559, %v561
        %vm563 = vcmask 7168
        %564 = vst.msk [vmem:[#allocation3] sm:$0xff] %vm563, %v562
        %565 = vst.msk [vmem:[#allocation2] sm:$0xff] %vm563, %v546
        %v566 = vpack.c.bf16 %v525, %v522
        %v567 = vpack.c.bf16 %v533, %v530
        %v568 = vpack.c.bf16 %v557, %v557
        %569 = vmatprep.subr.bf16.mxu0 0
        %570 = vmatpush1.bf16.xpose.msra.mxu0 0
        %571 = vmatprep.subr.bf16.mxu0 0
        %572 = vmatpush1.bf16.xpose.msra.mxu0 0
        %573 = vmatprep.subr.bf16.mxu0 0
        %574 = vmatpush1.bf16.xpose.msra.mxu0 0
        %575 = vmatprep.subr.bf16.mxu0 0
        %576 = vmatpush1.bf16.xpose.msra.mxu0 0
        %577 = vmatprep.subr.bf16.mxu0 0
        %578 = vmatpush1.bf16.xpose.msra.mxu0 0
        %579 = vmatprep.subr.bf16.mxu0 0
        %580 = vmatpush1.bf16.xpose.msra.mxu0 0
        %581 = vmatprep.subr.bf16.mxu0 0
        %582 = vmatpush1.bf16.xpose.msra.mxu0 0
        %583 = vmatprep.subr.bf16.mxu0 0
        %584 = vmatpush1.bf16.xpose.msra.mxu0 %v568
        %585 = vmatprep.subr.bf16.mxu0 0
        %586 = vmatpush2.bf16.xpose.msra.mxu0 0
        %587 = vmatprep.subr.bf16.mxu0 0
        %588 = vmatpush2.bf16.xpose.msra.mxu0 0
        %589 = vmatprep.subr.bf16.mxu0 0
        %590 = vmatpush2.bf16.xpose.msra.mxu0 0
        %591 = vmatprep.subr.bf16.mxu0 0
        %592 = vmatpush2.bf16.xpose.msra.mxu0 0
        %593 = vmatprep.subr.bf16.mxu0 0
        %594 = vmatpush2.bf16.xpose.msra.mxu0 0
        %595 = vmatprep.subr.bf16.mxu0 0
        %596 = vmatpush2.bf16.xpose.msra.mxu0 0
        %597 = vmatprep.subr.bf16.mxu0 0
        %598 = vmatpush2.bf16.xpose.msra.mxu0 0
        %599 = vmatprep.subr.bf16.mxu0 0
        %600 = vmatpush2.bf16.xpose.msra.mxu0 0
        %601 = vmatprep.mubr.bf16.mxu0 0
        %602 = vmatmul.mubr.bf16.gmra.mxu0 %v566
        %v603 = vpop.f32.mrf.mxu0
        %v604 = vadd.f32 0.0, %v603
        %v605 = vpop.f32.mrf.mxu0
        %v606 = vpop.f32.mrf.mxu0
        %v607 = vadd.f32 0.0, %v606
        %v608 = vpop.f32.mrf.mxu0
        %609 = vmatprep.mubr.bf16.mxu0 0
        %610 = vmatmul.mubr.bf16.gmra.mxu0 %v567
        %v611 = vpop.f32.mrf.mxu0
        %v612 = vadd.f32 0.0, %v611
        %v613 = vpop.f32.mrf.mxu0
        %v614 = vpop.f32.mrf.mxu0
        %v615 = vadd.f32 0.0, %v614
        %v616 = vpop.f32.mrf.mxu0
        %617 = vdwg.mxu0
        %v618 = vld [vmem:[#allocation4] sm:$0xff]
        %v619 = vld [vmem:[#allocation4 + $0x8] sm:$0xff]
        %v620 = vld [vmem:[#allocation4 + $0x10] sm:$0xff]
        %v621 = vld [vmem:[#allocation4 + $0x18] sm:$0xff]
        %v622 = vlaneseq
        %v623 = vshrl.u32 %v622, 7
        %v624 = vlaneseq
        %v625 = vand.u32 %v624, 127
        %vm626 = vcmp.eq.s32.totalorder %v623, %v625
        %628 = vset.pattern.permute.xlu0 0
        %629 = vperm.xlu0 %628, %v549
        %v630 = vpop.permute.xlu0 %629
        %v632 = vsel %vm626, %v630, 0.0
        %vm633 = vcmask 64512
        %v634 = vsel %vm633, %v632, 0.0
        %v635 = vrot.slane %v634, 4
        %v636 = vadd.f32 %v634, %v635
        %v637 = vrot.slane %v636, 2
        %v638 = vadd.f32 %v636, %v637
        %v639 = vrot.slane %v638, 1
        %v640 = vadd.f32 %v638, %v639
        %v641 = vmul.f32 %v618, %v640
        %v642 = vmul.f32 %v619, %v640
        %v643 = vmul.f32 %v620, %v640
        %v644 = vmul.f32 %v621, %v640
        %v645 = vadd.f32 %v641, %v604
        %v646 = vadd.f32 %v642, %v607
        %v647 = vadd.f32 %v643, %v612
        %v648 = vadd.f32 %v644, %v615
        %649 = vst.msk [vmem:[#allocation4] sm:$0xff] %vm633, %v645
        %650 = vst.msk [vmem:[#allocation4 + $0x8] sm:$0xff] %vm633, %v646
        %651 = vst.msk [vmem:[#allocation4 + $0x10] sm:$0xff] %vm633, %v647
        %652 = vst.msk [vmem:[#allocation4 + $0x18] sm:$0xff] %vm633, %v648
        %p653 = scmp.eq.s32.totalorder %s23, 1
        // Predicated region
        $region83: #{conv_tokenizer_forward.1} parent=73 // pred_check
          %p654 = pneg %p653
        $region84: #{conv_tokenizer_forward.1} parent=73 // pred_check_branch
          %656 = sbr.rel (%p654) target = $region86
        $region85: #{conv_tokenizer_forward.1} parent=73 // pred_region
          %v657 = vld [vmem:[#allocation3] sm:$0xff]
          %v658 = vrcp.pop %v657
          %v659 = vld [vmem:[#allocation4] sm:$0xff]
          %v660 = vld [vmem:[#allocation4 + $0x8] sm:$0xff]
          %v661 = vld [vmem:[#allocation4 + $0x10] sm:$0xff]
          %v662 = vld [vmem:[#allocation4 + $0x18] sm:$0xff]
          %664 = vset.pattern.permute.xlu0 0
          %665 = vperm.xlu0 %664, %v658
          %v666 = vpop.permute.xlu0 %665
          %v668 = vsel %vm626, %v666, 0.0
          %v669 = vsel %vm633, %v668, 0.0
          %v670 = vrot.slane %v669, 4
          %v671 = vadd.f32 %v669, %v670
          %v672 = vrot.slane %v671, 2
          %v673 = vadd.f32 %v671, %v672
          %v674 = vrot.slane %v673, 1
          %v675 = vadd.f32 %v673, %v674
          %v676 = vmul.f32 %v659, %v675
          %v677 = vmul.f32 %v660, %v675
          %v678 = vmul.f32 %v661, %v675
          %v679 = vmul.f32 %v662, %v675
          %680 = vst.msk [vmem:[%s315] sm:$0xff] %vm633, %v676
          %681 = vst.msk [vmem:[%s315 + $0x8] sm:$0xff] %vm633, %v677
          %682 = vst.msk [vmem:[%s315 + $0x10] sm:$0xff] %vm633, %v678
          %683 = vst.msk [vmem:[%s315 + $0x18] sm:$0xff] %vm633, %v679
        $region86: #{conv_tokenizer_forward.1} parent=73 // pred_fallthru
          _
        %s684 = sand.u32 %s152, 1
        %s685 = sand.u32 %s152, 1
        %s686 = smul.addr %s685, 32
        %s687 = scalar_lea.vmem [#allocation6], %s686
        %p688 = scmp.lt.s32.totalorder %s22, 1
        %s689 = scalar_select %p688, %s22, 1
        %s690 = smul.addr %s689, 4
        %s691 = smul.addr %s690, 8
        %s692 = scalar_lea.vmem %s6, %s691
        // Predicated region
        $region87: #{conv_tokenizer_forward.1} parent=73 // pred_check
          %p693 = pneg %p162
        $region88: #{conv_tokenizer_forward.1} parent=73 // pred_check_branch
          %695 = sbr.rel (%p693) target = $region90
        $region89: #{conv_tokenizer_forward.1} parent=73 // pred_region
          %s696 = smul.addr %s22, 8
          %s697 = sadd.s32 %s23, %s696
          %s698 = smul.addr %s697, 8
          %s699 = scalar_lea.vmem %s5, %s698
          // Predicated region
          $region91: #{conv_tokenizer_forward.1} parent=89 // pred_check
            _
          $region92: #{conv_tokenizer_forward.1} parent=89 // pred_check_branch
            %701 = sbr.rel (0) target = $region94
          $region93: #{conv_tokenizer_forward.1} parent=89 // pred_region
            // Predicated region
            $region95: #{conv_tokenizer_forward.1} parent=93 // pred_check
              _
            $region96: #{conv_tokenizer_forward.1} parent=93 // pred_check_branch
              %703 = sbr.rel (0) target = $region98
            $region97: #{conv_tokenizer_forward.1} parent=93 // pred_region
              // Predicated region
              $region110: #{conv_tokenizer_forward.1} parent=97 // pred_check
                _
              $region111: #{conv_tokenizer_forward.1} parent=97 // pred_check_branch
                %725 = sbr.rel (0) target = $region113
              $region112: #{conv_tokenizer_forward.1} parent=97 // pred_region
                loop: start=0, step=1, limit=1
                $region114: #{conv_tokenizer_forward.1} parent=112 // loop_pre_header
                  _
                $region115: #{conv_tokenizer_forward.1} parent=112 // loop_header
                  %s727 = sphi 0, %s731
                  %p728 = scmp.ge.s32.totalorder %s727, 1
                  %s732 = sphi %s687, %s687
                  %s733 = sphi %s699, %s699
                $region116: #{conv_tokenizer_forward.1} parent=112 // loop_header_branch
                  %730 = sbr.rel (%p728) target = $region120
                $region117: #{conv_tokenizer_forward.1} parent=112 // loop_body
                  %v734 = vld [vmem:[%s732] sm:$0xff]
                  %735 = vst [vmem:[%s733] sm:$0xff] %v734
                  %v736 = vld [vmem:[%s732 + $0x8] sm:$0xff]
                  %737 = vst [vmem:[%s733 + $0x10] sm:$0xff] %v736
                  %v738 = vld [vmem:[%s732 + $0x10] sm:$0xff]
                  %739 = vst [vmem:[%s733 + $0x20] sm:$0xff] %v738
                  %v740 = vld [vmem:[%s732 + $0x18] sm:$0xff]
                  %741 = vst [vmem:[%s733 + $0x30] sm:$0xff] %v740
                $region118: #{conv_tokenizer_forward.1} parent=112 // loop_footer
                  %s731 = sadd.s32 1, %s727
                $region119: #{conv_tokenizer_forward.1} parent=112 // loop_footer_branch
                  %726 = sbr.rel target = $region115
                $region120: #{conv_tokenizer_forward.1} parent=112 // loop_exit
                  _
              $region113: #{conv_tokenizer_forward.1} parent=97 // pred_fallthru
                _
              // Predicated region
              $region121: #{conv_tokenizer_forward.1} parent=97 // pred_check
                _
              $region122: #{conv_tokenizer_forward.1} parent=97 // pred_check_branch
                %743 = sbr.rel target = $region124
              $region123: #{conv_tokenizer_forward.1} parent=97 // pred_region
                _
              $region124: #{conv_tokenizer_forward.1} parent=97 // pred_fallthru
                _
            $region98: #{conv_tokenizer_forward.1} parent=93 // pred_fallthru
              _
            // Predicated region
            $region99: #{conv_tokenizer_forward.1} parent=93 // pred_check
              _
            $region100: #{conv_tokenizer_forward.1} parent=93 // pred_check_branch
              %705 = sbr.rel target = $region102
            $region101: #{conv_tokenizer_forward.1} parent=93 // pred_region
              %s707 = ssub.s32 256, 1
              loop: start=0, step=1, limit=1
              $region103: #{conv_tokenizer_forward.1} parent=101 // loop_pre_header
                _
              $region104: #{conv_tokenizer_forward.1} parent=101 // loop_header
                %s709 = sphi 0, %s713
                %p710 = scmp.ge.s32.totalorder %s709, 1
                %s714 = sphi %s687, %s687
                %s715 = sphi %s699, %s699
              $region105: #{conv_tokenizer_forward.1} parent=101 // loop_header_branch
                %712 = sbr.rel (%p710) target = $region109
              $region106: #{conv_tokenizer_forward.1} parent=101 // loop_body
                %v716 = vld [vmem:[%s714] sm:%s707]
                %717 = vst [vmem:[%s715] sm:%s707] %v716
                %v718 = vld [vmem:[%s714 + $0x8] sm:%s707]
                %719 = vst [vmem:[%s715 + $0x10] sm:%s707] %v718
                %v720 = vld [vmem:[%s714 + $0x10] sm:%s707]
                %721 = vst [vmem:[%s715 + $0x20] sm:%s707] %v720
                %v722 = vld [vmem:[%s714 + $0x18] sm:%s707]
                %723 = vst [vmem:[%s715 + $0x30] sm:%s707] %v722
              $region107: #{conv_tokenizer_forward.1} parent=101 // loop_footer
                %s713 = sadd.s32 1, %s709
              $region108: #{conv_tokenizer_forward.1} parent=101 // loop_footer_branch
                %708 = sbr.rel target = $region104
              $region109: #{conv_tokenizer_forward.1} parent=101 // loop_exit
                _
            $region102: #{conv_tokenizer_forward.1} parent=93 // pred_fallthru
              _
          $region94: #{conv_tokenizer_forward.1} parent=89 // pred_fallthru
            _
          %744 = vnop
        $region90: #{conv_tokenizer_forward.1} parent=73 // pred_fallthru
          _
        // Predicated region
        $region125: #{conv_tokenizer_forward.1} parent=73 // pred_check
          %p745 = pneg %p188
        $region126: #{conv_tokenizer_forward.1} parent=73 // pred_check_branch
          %747 = sbr.rel (%p745) target = $region128
        $region127: #{conv_tokenizer_forward.1} parent=73 // pred_region
          _
        $region128: #{conv_tokenizer_forward.1} parent=73 // pred_fallthru
          _
      $region74: #{conv_tokenizer_forward.1} parent=5 // pred_fallthru
        _
      %p748 = scmp.le.s32.totalorder 2, %s13
      // Predicated region
      $region129: #{conv_tokenizer_forward.1} parent=5 // pred_check
        %p749 = pneg %p748
      $region130: #{conv_tokenizer_forward.1} parent=5 // pred_check_branch
        %751 = sbr.rel (%p749) target = $region132
      $region131: #{conv_tokenizer_forward.1} parent=5 // pred_region
        %s752 = ssub.s32 %s13, 2
        // Predicated region
        $region133: #{conv_tokenizer_forward.1} parent=131 // pred_check
          %p753 = pneg %p168
        $region134: #{conv_tokenizer_forward.1} parent=131 // pred_check_branch
          %755 = sbr.rel (%p753) target = $region136
        $region135: #{conv_tokenizer_forward.1} parent=131 // pred_region
          %s756 = sand.u32 %s153, 1
          %s757 = sand.u32 %s153, 1
          %s758 = smul.addr %s757, 32
          %s759 = scalar_lea.vmem [#allocation6], %s758
        $region136: #{conv_tokenizer_forward.1} parent=131 // pred_fallthru
          _
        // Predicated region
        $region137: #{conv_tokenizer_forward.1} parent=131 // pred_check
          %p760 = pneg %p194
        $region138: #{conv_tokenizer_forward.1} parent=131 // pred_check_branch
          %762 = sbr.rel (%p760) target = $region140
        $region139: #{conv_tokenizer_forward.1} parent=131 // pred_region
          %p763 = scmp.lt.s32.totalorder %s24, 1
          %s764 = scalar_select %p763, %s24, 1
          %s765 = smul.addr %s764, 4
          %s766 = smul.addr %s765, 8
          %s767 = scalar_lea.vmem %s6, %s766
        $region140: #{conv_tokenizer_forward.1} parent=131 // pred_fallthru
          _
      $region132: #{conv_tokenizer_forward.1} parent=5 // pred_fallthru
        _
    $region6: #{conv_tokenizer_forward.1} parent=1 // loop_footer
      %s17 = sadd.s32 1, %s13
    $region7: #{conv_tokenizer_forward.1} parent=1 // loop_footer_branch
      %12 = sbr.rel target = $region3
    $region8: #{conv_tokenizer_forward.1} parent=1 // loop_exit
      _

</llo_original>
